<compile_context>
chip_gen: v7x
topology: tpu7x:2x2x1
jax: 0.10.0
libtpu: 0.0.40
codegen_flags: <defaults>
</compile_context>

<pallas_src>
import functools

import jax
import jax.numpy as jnp
from jax.experimental import pallas as pl
from jax.experimental.pallas import tpu as pltpu

LANES = 128
MAX_TILE_ROWS = 4096     # (4096,128) f32 block = 2 MiB per double-buffered input
NUM_SHARDS = 2           # leading "parallel" axis -> both TensorCores on v7x
OUT_ROWS = 8             # per-shard partial-sum block = one f32 vreg


def _sublane_multiple(dtype) -> int:
    """Native sublane packing: 8 for 4-byte, 16 for 2-byte, 32 for 1-byte dtypes."""
    return max(8, 32 // jnp.dtype(dtype).itemsize)


def _round_up(a: int, b: int) -> int:
    return (a + b - 1) // b * b


def _bce_partial_kernel(x_ref, t_ref, o_ref, *, steps, block_rows,
                        full_rows, rem_lanes, needs_mask):
    """Per step: BCE-with-logits over a (block_rows, 128) tile, folded into an
    (8, 128) f32 accumulator block that stays VMEM-resident across axis i."""
    i = pl.program_id(1)

    @pl.when(i == 0)
    def _():
        o_ref[...] = jnp.zeros_like(o_ref)

    x = x_ref[...].astype(jnp.float32)
    t = t_ref[...].astype(jnp.float32)
    # Numerically-stable BCE with logits (== torch.nn.BCEWithLogitsLoss):
    #   max(x, 0) - x*t + log1p(exp(-|x|))
    # TODO(synk): if a bundle dump shows v5e's single EUP saturated for bf16
    # inputs, replace log1p(exp(.)) with a VPU polynomial softplus.
    loss = jnp.maximum(x, 0.0) - x * t + jnp.log1p(jnp.exp(-jnp.abs(x)))

    if needs_mask:
        # Element-validity mask from the UNCLAMPED global block index: rows
        # past the true element count (ragged tail, partial edge block, or a
        # fully out-of-range step on the last shard) contribute exactly 0,
        # regardless of what the (possibly clamped/garbage) DMA loaded.
        s = pl.program_id(0)
        blk = s * steps + i
        row_idx = blk * block_rows + jax.lax.broadcasted_iota(
            jnp.int32, (block_rows, LANES), 0)
        lane_idx = jax.lax.broadcasted_iota(jnp.int32, (block_rows, LANES), 1)
        valid = (row_idx < full_rows) | ((row_idx == full_rows)
                                         & (lane_idx < rem_lanes))
        loss = jnp.where(valid, loss, 0.0)

    if block_rows == OUT_ROWS:
        o_ref[...] += loss
    else:
        # Sublane-group fold (block_rows,128) -> (8,128): tile-aligned reshape
        # (no relayout) + a chain of pure vector adds.
        o_ref[...] += loss.reshape(block_rows // OUT_ROWS, OUT_ROWS,
                                   LANES).sum(axis=0)


def adaptive_mask_loss_2d(logits_nchw, target_nchw):
    """BCEWithLogitsLoss(mean) after the identity bilinear 'resize' of logits."""
    x = logits_nchw
    t = target_nchw
    assert x.shape == t.shape, (x.shape, t.shape)

    # Binary masks may arrive as bool; keep them 1 byte on the wire.
    if t.dtype == jnp.bool_:
        t = t.astype(jnp.int8)

    n_total = x.size
    full_rows, rem_lanes = divmod(n_total, LANES)
    rows = full_rows + (1 if rem_lanes else 0)

    sublane_mult = max(_sublane_multiple(x.dtype), _sublane_multiple(t.dtype))
    block_rows = min(MAX_TILE_ROWS,
                     _round_up(pl.cdiv(rows, NUM_SHARDS), sublane_mult))
    total_blocks = pl.cdiv(rows, block_rows)
    steps = pl.cdiv(total_blocks, NUM_SHARDS)
    needs_mask = (rem_lanes != 0 or rows % block_rows != 0
                  or total_blocks % NUM_SHARDS != 0)

    # Common case (numel % 128 == 0, array >= one block): zero-copy reshape.
    # Rare ragged/tiny case: minimal zero pad (values are masked in-kernel).
    arr_rows = max(rows, block_rows)
    xf = x.reshape(-1)
    tf = t.reshape(-1)
    pad_elems = arr_rows * LANES - n_total
    if pad_elems:
        xf = jnp.pad(xf, (0, pad_elems))
        tf = jnp.pad(tf, (0, pad_elems))
    x2 = xf.reshape(arr_rows, LANES)
    t2 = tf.reshape(arr_rows, LANES)

    def in_index(s, i):
        # Clamp so a DMA never targets a block wholly past the array end; such
        # steps are zeroed in-kernel via the unclamped-index mask.
        return (jnp.minimum(s * steps + i, total_blocks - 1), 0)

    kernel = functools.partial(
        _bce_partial_kernel, steps=steps, block_rows=block_rows,
        full_rows=full_rows, rem_lanes=rem_lanes, needs_mask=needs_mask)

    partials = pl.pallas_call(
        kernel,
        out_shape=jax.ShapeDtypeStruct((NUM_SHARDS * OUT_ROWS, LANES),
                                       jnp.float32),
        grid_spec=pltpu.PrefetchScalarGridSpec(
            num_scalar_prefetch=0,
            grid=(NUM_SHARDS, steps),
            in_specs=[
                pl.BlockSpec((block_rows, LANES), in_index),
                pl.BlockSpec((block_rows, LANES), in_index),
            ],
            # Same block index across the reduction axis i -> the (8,128)
            # accumulator stays VMEM-resident; one 4 KiB writeback per shard.
            out_specs=pl.BlockSpec((OUT_ROWS, LANES), lambda s, i: (s, 0)),
        ),
        compiler_params=pltpu.CompilerParams(
            dimension_semantics=("parallel", "arbitrary"),
            vmem_limit_bytes=32 * 1024 * 1024),
    )(x2, t2)

    # Tiny (8 KiB) final cross-lane reduce + mean over the true element count.
    return jnp.sum(partials) / jnp.float32(n_total)


def _reference(logits, target):
    x = logits.astype(jnp.float32)
    t = target.astype(jnp.float32)
    loss = jnp.maximum(x, 0.0) - x * t + jnp.log1p(jnp.exp(-jnp.abs(x)))
    return jnp.mean(loss)


if __name__ == "__main__":
    key = jax.random.PRNGKey(0)
    k1, k2, k3, k4, k5, k6 = jax.random.split(key, 6)

    # 1) Canonical NCHW case, numel % 128 == 0 -> zero-copy (no pad) path.
    x1 = jax.random.normal(k1, (2, 4, 16, 16), dtype=jnp.float32)
    t1 = (jax.random.uniform(k2, (2, 4, 16, 16)) > 0.5).astype(jnp.float32)
    out1 = jax.block_until_ready(adaptive_mask_loss_2d(x1, t1))
    ref1 = jax.block_until_ready(_reference(x1, t1))
    assert jnp.allclose(out1, ref1, rtol=1e-5, atol=1e-5), (out1, ref1)

    # 2) Ragged case (numel % 128 != 0) -> exercises the in-kernel mask.
    x2 = jax.random.normal(k3, (2, 3, 17, 19), dtype=jnp.float32)
    t2 = (jax.random.uniform(k4, (2, 3, 17, 19)) > 0.5).astype(jnp.float32)
    out2 = jax.block_until_ready(adaptive_mask_loss_2d(x2, t2))
    ref2 = jax.block_until_ready(_reference(x2, t2))
    assert jnp.allclose(out2, ref2, rtol=1e-5, atol=1e-5), (out2, ref2)

    # 3) bf16 logits + int8 mask: native-dtype streaming, 16/32-row sublane
    #    packing, and the multi-group sublane fold (block_rows > 8).
    x3 = jax.random.normal(k5, (2, 4, 32, 32), dtype=jnp.bfloat16)
    t3 = (jax.random.uniform(k6, (2, 4, 32, 32)) > 0.5).astype(jnp.int8)
    out3 = jax.block_until_ready(adaptive_mask_loss_2d(x3, t3))
    ref3 = jax.block_until_ready(_reference(x3, t3))
    assert jnp.allclose(out3, ref3, rtol=1e-5, atol=1e-5), (out3, ref3)

    print("KERNEL_OK")
</pallas_src>

<mosaic_0001>
module attributes {stable_mosaic.version = 11 : i64} {
  func.func @_bce_partial_kernel(%arg0: i32, %arg1: i32, %arg2: memref<8x128xf32, #tpu.memory_space<vmem>>, %arg3: memref<8x128xf32, #tpu.memory_space<vmem>>, %arg4: memref<8x128xf32, #tpu.memory_space<vmem>>) attributes {dimension_semantics = [#tpu.dimension_semantics<parallel>, #tpu.dimension_semantics<arbitrary>], iteration_bounds = array<i64: 2, 1>, scalar_prefetch = 0 : i64, scratch_operands = 0 : i64, tpu.core_type = #tpu.core_type<tc>, window_params = [{transform_indices = @transform_0, window_bounds = array<i64: 8, 128>}, {transform_indices = @transform_1, window_bounds = array<i64: 8, 128>}, {transform_indices = @transform_2, window_bounds = array<i64: 8, 128>}]} {
    %c0_i32 = arith.constant 0 : i32
    %0 = arith.cmpi eq, %arg1, %c0_i32 : i32
    %1 = arith.extui %0 : i1 to i32
    %c0_i32_0 = arith.constant 0 : i32
    %2 = arith.cmpi ne, %1, %c0_i32_0 : i32
    scf.if %2 {
      %cst_9 = arith.constant 0.000000e+00 : f32
      %18 = vector.broadcast %cst_9 : f32 to vector<8x128xf32>
      %c0_10 = arith.constant 0 : index
      %c0_11 = arith.constant 0 : index
      %19 = vector.load %arg4[%c0_10, %c0_11] : memref<8x128xf32, #tpu.memory_space<vmem>>, vector<8x128xf32>
      tpu.vector_store %arg4[%c0_10, %c0_11], %18 {strides = array<i32>} : memref<8x128xf32, #tpu.memory_space<vmem>>, vector<8x128xf32>,
    } else {
    }
    %c0 = arith.constant 0 : index
    %c0_1 = arith.constant 0 : index
    %3 = vector.load %arg2[%c0, %c0_1] : memref<8x128xf32, #tpu.memory_space<vmem>>, vector<8x128xf32>
    %c0_2 = arith.constant 0 : index
    %c0_3 = arith.constant 0 : index
    %4 = vector.load %arg3[%c0_2, %c0_3] : memref<8x128xf32, #tpu.memory_space<vmem>>, vector<8x128xf32>
    %cst = arith.constant 0.000000e+00 : f32
    %5 = vector.broadcast %cst : f32 to vector<8x128xf32>
    %6 = arith.maximumf %3, %5 : vector<8x128xf32>
    %7 = arith.mulf %3, %4 : vector<8x128xf32>
    %8 = arith.subf %6, %7 : vector<8x128xf32>
    %9 = math.absf %3 : vector<8x128xf32>
    %cst_4 = arith.constant 0.000000e+00 : f32
    %10 = vector.broadcast %cst_4 : f32 to vector<8x128xf32>
    %11 = arith.subf %10, %9 : vector<8x128xf32>
    %12 = math.exp %11 : vector<8x128xf32>
    %13 = math.log1p %12 : vector<8x128xf32>
    %14 = arith.addf %8, %13 : vector<8x128xf32>
    %c0_5 = arith.constant 0 : index
    %c0_6 = arith.constant 0 : index
    %15 = vector.load %arg4[%c0_5, %c0_6] : memref<8x128xf32, #tpu.memory_space<vmem>>, vector<8x128xf32>
    %16 = arith.addf %15, %14 : vector<8x128xf32>
    %c0_7 = arith.constant 0 : index
    %c0_8 = arith.constant 0 : index
    %17 = vector.load %arg4[%c0_7, %c0_8] : memref<8x128xf32, #tpu.memory_space<vmem>>, vector<8x128xf32>
    tpu.vector_store %arg4[%c0_7, %c0_8], %16 {strides = array<i32>} : memref<8x128xf32, #tpu.memory_space<vmem>>, vector<8x128xf32>,
    return
  }
  func.func @transform_0(%arg0: i32, %arg1: i32) -> (i32, i32) {
    %c1_i32 = arith.constant 1 : i32
    %0 = arith.muli %arg0, %c1_i32 : i32
    %1 = arith.addi %0, %arg1 : i32
    %c1_i32_0 = arith.constant 1 : i32
    %2 = arith.minsi %1, %c1_i32_0 : i32
    %c0_i32 = arith.constant 0 : i32
    %c0_i32_1 = arith.constant 0 : i32
    return %2, %c0_i32 : i32, i32
  }
  func.func @transform_1(%arg0: i32, %arg1: i32) -> (i32, i32) {
    %c1_i32 = arith.constant 1 : i32
    %0 = arith.muli %arg0, %c1_i32 : i32
    %1 = arith.addi %0, %arg1 : i32
    %c1_i32_0 = arith.constant 1 : i32
    %2 = arith.minsi %1, %c1_i32_0 : i32
    %c0_i32 = arith.constant 0 : i32
    %c0_i32_1 = arith.constant 0 : i32
    return %2, %c0_i32 : i32, i32
  }
  func.func @transform_2(%arg0: i32, %arg1: i32) -> (i32, i32) {
    %c0_i32 = arith.constant 0 : i32
    %c0_i32_0 = arith.constant 0 : i32
    return %arg0, %c0_i32 : i32, i32
  }
}

</mosaic_0001>

<llo_original>
// kernel: tpu_custom_call.1
$region0: #{tpu_custom_call.1}
  #allocation0 [shape = 'u32[]', space=smem, size = 0x4, offset = 0x4, fixed_abs, tag = 'smem constant byte address 0x4 - core index']
  #allocation1 [shape = 'u32[144,128]{1,0:T(1,128)}', space=vmem, size = 0x12000, scoped, tag = 'internal scratch']
  %s0 = inlined_call_operand.hbm [shape: f32[16,128], index: 0, kind: input, shape index: {}]
  %s1 = inlined_call_operand.hbm [shape: f32[16,128], index: 1, kind: input, shape index: {}]
  %s2 = inlined_call_operand.hbm [shape: f32[16,128], index: 2, kind: output, shape index: {}]
  %s3 = sld [smem:[#allocation0]]
  $region53: #{tpu_custom_call.1} parent=0
    _
  %s5 = ssub.s32 1, %s3
  %s6 = scalar_select 0, %s5, %s3
  $region1: #{tpu_custom_call.1} parent=0
    #allocation2 [shape = 'u8[8192]{0}', space=vmem, size = 0x2000, scoped, tag = 'input window, operand 0']
    #allocation3 [shape = 's32[2]{0}', space=sflag, size = 0x8, scoped, tag = 'scoped memory for tpu_custom_call.1']
    #allocation4 [shape = 's32[2]{0}', space=sflag, size = 0x8, scoped, tag = 'scoped memory for tpu_custom_call.1']
    #allocation5 [shape = 'u8[8192]{0}', space=vmem, size = 0x2000, scoped, tag = 'input window, operand 1']
    #allocation6 [shape = 's32[2]{0}', space=sflag, size = 0x8, scoped, tag = 'scoped memory for tpu_custom_call.1']
    #allocation7 [shape = 'u8[8192]{0}', space=vmem, size = 0x2000, scoped, tag = 'output window, operand 0']
    %7 = vsyncpa [#allocation3], 0
    %s8 = scalar_lea.sflag [#allocation3], 1
    %9 = vsyncpa %s8, 0
    %10 = vsyncpa [#allocation6], 0
    %s11 = scalar_lea.sflag [#allocation6], 1
    %12 = vsyncpa %s11, 0
    %13 = vsyncpa [#allocation4], 0
    %s14 = scalar_lea.sflag [#allocation4], 1
    %15 = vsyncpa %s14, 0
    loop: start=0, step=1, limit=4
    $region2: #{tpu_custom_call.1} parent=1 // loop_pre_header
      _
    $region3: #{tpu_custom_call.1} parent=1 // loop_header
      %s17 = sphi 0, %s21
      %p18 = scmp.ge.s32.totalorder %s17, 4
      %s24 = sphi 0, %s36
      %s25 = sphi 0, %s32
      %s26 = sphi 0, %s24
      %s27 = sphi 0, %s25
      %s28 = sphi 0, %s26
      %s29 = sphi 0, %s27
      %s45 = sphi 0, %s47
      %s48 = sphi 0, %s45
      %s49 = sphi 0, %s48
      %s65 = sphi 0, %s49
      %s77 = sphi 0, %s79
      %s80 = sphi 0, %s77
      %s81 = sphi 0, %s80
      %s97 = sphi 0, %s81
      %s103 = sphi 0, %s105
      %s106 = sphi 0, %s103
      %s107 = sphi 0, %s106
      %s123 = sphi 0, %s107
    $region4: #{tpu_custom_call.1} parent=1 // loop_header_branch
      %20 = sbr.rel (%p18) target = $region8
    $region5: #{tpu_custom_call.1} parent=1 // loop_body
      %s22 = ssub.s32 %s17, 1
      %s23 = ssub.s32 %s17, 2
      %s30 = sadd.s32 1, %s25
      %p31 = scmp.ge.s32.totalorder %s30, 1
      %s32 = scalar_select %p31, 0, %s30
      %s33 = sadd.s32 1, %s24
      %s34 = scalar_select %p31, %s33, %s24
      %p35 = scmp.ge.s32.totalorder %s34, 2
      %s36 = scalar_select %p35, 0, %s34
      %s37 = sadd.s32 %s24, %s25
      %p38 = scmp.lt.s32.totalorder %s37, 1
      %s39 = scalar_select %p38, %s37, 1
      %s40 = sadd.s32 %s36, %s32
      %p41 = scmp.lt.s32.totalorder %s40, 1
      %s42 = scalar_select %p41, %s40, 1
      %s43 = ssub.s32 %s39, %s42
      %p44 = scmp.eq.s32.totalorder %s43, 0
      %s46 = sadd.s32 %s45, 1
      %s47 = scalar_select %p44, %s45, %s46
      %p50 = pneg %p44
      %p51 = scmp.eq.s32.totalorder %s17, 1
      %p52 = por %p50, %p51
      %p53 = scmp.ne.s32.totalorder %s45, %s48
      %p54 = scmp.eq.s32.totalorder %s17, 0
      %p55 = por %p53, %p54
      %p56 = scmp.ne.s32.totalorder %s45, %s48
      %p57 = scmp.eq.s32.totalorder %s22, 1
      %p58 = por %p56, %p57
      %p59 = scmp.ne.s32.totalorder %s48, %s49
      %p60 = scmp.eq.s32.totalorder %s22, 0
      %p61 = por %p59, %p60
      %p62 = scmp.ne.s32.totalorder %s48, %s49
      %p63 = scmp.eq.s32.totalorder %s23, 1
      %p64 = por %p62, %p63
      %p66 = scmp.ne.s32.totalorder %s49, %s65
      %p67 = scmp.eq.s32.totalorder %s23, 0
      %p68 = por %p66, %p67
      %s69 = sadd.s32 %s24, %s25
      %p70 = scmp.lt.s32.totalorder %s69, 1
      %s71 = scalar_select %p70, %s69, 1
      %s72 = sadd.s32 %s36, %s32
      %p73 = scmp.lt.s32.totalorder %s72, 1
      %s74 = scalar_select %p73, %s72, 1
      %s75 = ssub.s32 %s71, %s74
      %p76 = scmp.eq.s32.totalorder %s75, 0
      %s78 = sadd.s32 %s77, 1
      %s79 = scalar_select %p76, %s77, %s78
      %p82 = pneg %p76
      %p83 = scmp.eq.s32.totalorder %s17, 1
      %p84 = por %p82, %p83
      %p85 = scmp.ne.s32.totalorder %s77, %s80
      %p86 = scmp.eq.s32.totalorder %s17, 0
      %p87 = por %p85, %p86
      %p88 = scmp.ne.s32.totalorder %s77, %s80
      %p89 = scmp.eq.s32.totalorder %s22, 1
      %p90 = por %p88, %p89
      %p91 = scmp.ne.s32.totalorder %s80, %s81
      %p92 = scmp.eq.s32.totalorder %s22, 0
      %p93 = por %p91, %p92
      %p94 = scmp.ne.s32.totalorder %s80, %s81
      %p95 = scmp.eq.s32.totalorder %s23, 1
      %p96 = por %p94, %p95
      %p98 = scmp.ne.s32.totalorder %s81, %s97
      %p99 = scmp.eq.s32.totalorder %s23, 0
      %p100 = por %p98, %p99
      %s101 = ssub.s32 %s24, %s36
      %p102 = scmp.eq.s32.totalorder %s101, 0
      %s104 = sadd.s32 %s103, 1
      %s105 = scalar_select %p102, %s103, %s104
      %p108 = pneg %p102
      %p109 = scmp.eq.s32.totalorder %s17, 1
      %p110 = por %p108, %p109
      %p111 = scmp.ne.s32.totalorder %s103, %s106
      %p112 = scmp.eq.s32.totalorder %s17, 0
      %p113 = por %p111, %p112
      %p114 = scmp.ne.s32.totalorder %s103, %s106
      %p115 = scmp.eq.s32.totalorder %s22, 1
      %p116 = por %p114, %p115
      %p117 = scmp.ne.s32.totalorder %s106, %s107
      %p118 = scmp.eq.s32.totalorder %s22, 0
      %p119 = por %p117, %p118
      %p120 = scmp.ne.s32.totalorder %s106, %s107
      %p121 = scmp.eq.s32.totalorder %s23, 1
      %p122 = por %p120, %p121
      %p124 = scmp.ne.s32.totalorder %s107, %s123
      %p125 = scmp.eq.s32.totalorder %s23, 0
      %p126 = por %p124, %p125
      %p127 = scmp.le.s32.totalorder 1, %s17
      %p128 = scmp.lt.s32.totalorder %s17, 3
      %p129 = pnand %p127, %p128
      %p130 = pneg %p129
      // Predicated region
      $region9: #{tpu_custom_call.1} parent=5 // pred_check
        _
      $region10: #{tpu_custom_call.1} parent=5 // pred_check_branch
        %132 = sbr.rel (%p129) target = $region12
      $region11: #{tpu_custom_call.1} parent=5 // pred_region
        %s133 = ssub.s32 %s17, 1
      $region12: #{tpu_custom_call.1} parent=5 // pred_fallthru
        _
      %p134 = scmp.lt.s32.totalorder %s17, 2
      // Predicated region
      $region13: #{tpu_custom_call.1} parent=5 // pred_check
        %p135 = pneg %p134
      $region14: #{tpu_custom_call.1} parent=5 // pred_check_branch
        %137 = sbr.rel (%p135) target = $region16
      $region15: #{tpu_custom_call.1} parent=5 // pred_region
        // Predicated region
        $region17: #{tpu_custom_call.1} parent=15 // pred_check
          %p138 = pneg %p55
        $region18: #{tpu_custom_call.1} parent=15 // pred_check_branch
          %140 = sbr.rel (%p138) target = $region20
        $region19: #{tpu_custom_call.1} parent=15 // pred_region
          %s141 = sand.u32 %s45, 1
          %s142 = scalar_lea.sflag [#allocation3], %s141
          %s143 = sand.u32 %s45, 1
          %s144 = smul.addr %s143, 8
          %s145 = scalar_lea.vmem [#allocation2], %s144
          %s146 = sadd.s32 %s24, %s25
          %p147 = scmp.lt.s32.totalorder %s146, 1
          %s148 = scalar_select %p147, %s146, 1
          %s150 = ssub.s32 128, 128
          %151 = vsyncadd %s142, %s150
          %s152 = smul.addr %s148, 128
          %s153 = scalar_lea.hbm %s0, %s152
          %s155 = sshll.u32 %s145, 4
          %s156 = int_to_ptr.vmem [resolvable:$true] %s155
          %158 = dma.hbm_to_vmem [thread:$0]  %s153, 128, %s156, %s142
        $region20: #{tpu_custom_call.1} parent=15 // pred_fallthru
          _
        // Predicated region
        $region21: #{tpu_custom_call.1} parent=15 // pred_check
          %p159 = pneg %p87
        $region22: #{tpu_custom_call.1} parent=15 // pred_check_branch
          %161 = sbr.rel (%p159) target = $region24
        $region23: #{tpu_custom_call.1} parent=15 // pred_region
          %s162 = sand.u32 %s77, 1
          %s163 = scalar_lea.sflag [#allocation6], %s162
          %s164 = sand.u32 %s77, 1
          %s165 = smul.addr %s164, 8
          %s166 = scalar_lea.vmem [#allocation5], %s165
          %s167 = sadd.s32 %s24, %s25
          %p168 = scmp.lt.s32.totalorder %s167, 1
          %s169 = scalar_select %p168, %s167, 1
          %s171 = ssub.s32 128, 128
          %172 = vsyncadd %s163, %s171
          %s173 = smul.addr %s169, 128
          %s174 = scalar_lea.hbm %s1, %s173
          %s176 = sshll.u32 %s166, 4
          %s177 = int_to_ptr.vmem [resolvable:$true] %s176
          %179 = dma.hbm_to_vmem [thread:$0]  %s174, 128, %s177, %s163
        $region24: #{tpu_custom_call.1} parent=15 // pred_fallthru
          _
      $region16: #{tpu_custom_call.1} parent=5 // pred_fallthru
        _
      %p180 = scmp.le.s32.totalorder 1, %s17
      %p181 = scmp.lt.s32.totalorder %s17, 3
      %p182 = pnand %p180, %p181
      %p183 = pneg %p182
      // Predicated region
      $region25: #{tpu_custom_call.1} parent=5 // pred_check
        _
      $region26: #{tpu_custom_call.1} parent=5 // pred_check_branch
        %185 = sbr.rel (%p182) target = $region28
      $region27: #{tpu_custom_call.1} parent=5 // pred_region
        %s186 = ssub.s32 %s17, 1
        %s187 = sand.u32 %s48, 1
        %s188 = scalar_lea.sflag [#allocation3], %s187
        %s189 = sand.u32 %s48, 1
        %s190 = smul.addr %s189, 8
        %s191 = scalar_lea.vmem [#allocation2], %s190
        // Predicated region
        $region29: #{tpu_custom_call.1} parent=27 // pred_check
          %p192 = pneg %p61
        $region30: #{tpu_custom_call.1} parent=27 // pred_check_branch
          %194 = sbr.rel (%p192) target = $region32
        $region31: #{tpu_custom_call.1} parent=27 // pred_region
          %195 = dma.done %s188, 128
        $region32: #{tpu_custom_call.1} parent=27 // pred_fallthru
          _
        %s196 = sand.u32 %s80, 1
        %s197 = scalar_lea.sflag [#allocation6], %s196
        %s198 = sand.u32 %s80, 1
        %s199 = smul.addr %s198, 8
        %s200 = scalar_lea.vmem [#allocation5], %s199
        // Predicated region
        $region33: #{tpu_custom_call.1} parent=27 // pred_check
          %p201 = pneg %p93
        $region34: #{tpu_custom_call.1} parent=27 // pred_check_branch
          %203 = sbr.rel (%p201) target = $region36
        $region35: #{tpu_custom_call.1} parent=27 // pred_region
          %204 = dma.done %s197, 128
        $region36: #{tpu_custom_call.1} parent=27 // pred_fallthru
          _
        %s205 = sand.u32 %s48, 1
        %s206 = scalar_lea.sflag [#allocation3], %s205
        %s207 = sand.u32 %s48, 1
        %s208 = smul.addr %s207, 8
        %s209 = scalar_lea.vmem [#allocation2], %s208
        %p210 = pneg %p61
        %p211 = pneg %p58
        %s212 = sand.u32 %s80, 1
        %s213 = scalar_lea.sflag [#allocation6], %s212
        %s214 = sand.u32 %s80, 1
        %s215 = smul.addr %s214, 8
        %s216 = scalar_lea.vmem [#allocation5], %s215
        %p217 = pneg %p93
        %p218 = pneg %p90
        %p219 = pneg %p119
        %p220 = pneg %p116
        %s221 = sand.u32 %s106, 1
        %s222 = scalar_lea.sflag [#allocation4], %s221
        %s223 = sand.u32 %s106, 1
        %s224 = smul.addr %s223, 8
        %s225 = scalar_lea.vmem [#allocation7], %s224
        %s226 = sadd.s32 %s26, %s27
        %p227 = scmp.lt.s32.totalorder %s226, 1
        %s228 = scalar_select %p227, %s226, 1
        %s229 = sadd.s32 %s26, %s27
        %p230 = scmp.lt.s32.totalorder %s229, 1
        %s231 = scalar_select %p230, %s229, 1
        %p232 = scmp.eq.s32.totalorder %s27, 0
        // Predicated region
        $region37: #{tpu_custom_call.1} parent=27 // pred_check
          %p233 = pneg %p232
        $region38: #{tpu_custom_call.1} parent=27 // pred_check_branch
          %235 = sbr.rel (%p233) target = $region40
        $region39: #{tpu_custom_call.1} parent=27 // pred_region
          %236 = vst [vmem:[%s225] sm:$0xff] 0.0
        $region40: #{tpu_custom_call.1} parent=27 // pred_fallthru
          _
        %v237 = vld [vmem:[%s191] sm:$0xff]
        %v238 = vld [vmem:[%s200] sm:$0xff]
        %v239 = vmax.f32 %v237, 0.0
        %v240 = vmul.f32 %v237, %v238
        %v241 = vsub.f32 %v239, %v240
        %v242 = vand.u32 2147483647, %v237
        %v243 = vsub.f32 0.0, %v242
        %v244 = vmul.f32 %v243, 1.442695
        %v245 = vpow.pop %v244
        %v246 = vadd.f32 %v245, 1.0
        %v247 = vlog2.pop %v246
        %v248 = vmul.f32 %v247, 0.6931472
        %v249 = vmul.f32 -0.5, %v245
        %v250 = vadd.f32 %v249, 1.0
        %v251 = vmul.f32 %v250, %v245
        %v252 = vand.u32 2147483647, %v245
        %vm253 = vcmp.lt.f32.partialorder %v252, 0.0004427343
        %v254 = vsel %vm253, %v251, %v248
        %v255 = vadd.f32 %v241, %v254
        %v256 = vld [vmem:[%s225] sm:$0xff]
        %v257 = vadd.f32 %v256, %v255
        %258 = vst [vmem:[%s225] sm:$0xff] %v257
        %s259 = sand.u32 %s106, 1
        %s260 = scalar_lea.sflag [#allocation4], %s259
        %s261 = sand.u32 %s106, 1
        %s262 = smul.addr %s261, 8
        %s263 = scalar_lea.vmem [#allocation7], %s262
        // Predicated region
        $region41: #{tpu_custom_call.1} parent=27 // pred_check
          %p264 = pneg %p116
        $region42: #{tpu_custom_call.1} parent=27 // pred_check_branch
          %266 = sbr.rel (%p264) target = $region44
        $region43: #{tpu_custom_call.1} parent=27 // pred_region
          %s268 = ssub.s32 128, 128
          %269 = vsyncadd %s260, %s268
          %s270 = smul.addr %s26, 128
          %s271 = scalar_lea.hbm %s2, %s270
          %s273 = sshll.u32 %s263, 4
          %s274 = int_to_ptr.vmem [resolvable:$true] %s273
          %276 = dma.vmem_to_hbm [thread:$0]  %s274, 128, %s271, %s260
        $region44: #{tpu_custom_call.1} parent=27 // pred_fallthru
          _
      $region28: #{tpu_custom_call.1} parent=5 // pred_fallthru
        _
      %p277 = scmp.le.s32.totalorder 2, %s17
      // Predicated region
      $region45: #{tpu_custom_call.1} parent=5 // pred_check
        %p278 = pneg %p277
      $region46: #{tpu_custom_call.1} parent=5 // pred_check_branch
        %280 = sbr.rel (%p278) target = $region48
      $region47: #{tpu_custom_call.1} parent=5 // pred_region
        %s281 = ssub.s32 %s17, 2
        // Predicated region
        $region49: #{tpu_custom_call.1} parent=47 // pred_check
          %p282 = pneg %p122
        $region50: #{tpu_custom_call.1} parent=47 // pred_check_branch
          %284 = sbr.rel (%p282) target = $region52
        $region51: #{tpu_custom_call.1} parent=47 // pred_region
          %s285 = sand.u32 %s107, 1
          %s286 = scalar_lea.sflag [#allocation4], %s285
          %s287 = sand.u32 %s107, 1
          %s288 = smul.addr %s287, 8
          %s289 = scalar_lea.vmem [#allocation7], %s288
          %290 = dma.done %s286, 128
        $region52: #{tpu_custom_call.1} parent=47 // pred_fallthru
          _
      $region48: #{tpu_custom_call.1} parent=5 // pred_fallthru
        _
    $region6: #{tpu_custom_call.1} parent=1 // loop_footer
      %s21 = sadd.s32 1, %s17
    $region7: #{tpu_custom_call.1} parent=1 // loop_footer_branch
      %16 = sbr.rel target = $region3
    $region8: #{tpu_custom_call.1} parent=1 // loop_exit
      _
    %291 = vsyncpa [#allocation3], 1
    %s292 = scalar_lea.sflag [#allocation3], 1
    %293 = vsyncpa %s292, 1
    %294 = vsyncpa [#allocation6], 1
    %s295 = scalar_lea.sflag [#allocation6], 1
    %296 = vsyncpa %s295, 1
    %297 = vsyncpa [#allocation4], 1
    %s298 = scalar_lea.sflag [#allocation4], 1
    %299 = vsyncpa %s298, 1

</llo_original>
